<compile_context>
chip_gen: v7x
topology: tpu7x:2x2x1
jax: 0.10.0
libtpu: 0.0.40
codegen_flags: <defaults>
</compile_context>

<pallas_src>
import functools

import jax
import jax.numpy as jnp
from jax.experimental import pallas as pl
from jax.experimental.pallas import tpu as pltpu


def mlp_square_kernel(x_ref, w1_ref, b1_ref, w2_ref, b2_ref, o_ref):
    # layer1: Linear(input_size, hidden_size) — accumulate in f32 on the MXU.
    h = jnp.dot(x_ref[...], w1_ref[...], preferred_element_type=jnp.float32)
    h = h + b1_ref[...]              # (1, hid_p) broadcast over the batch tile (f32)
    # activation_function == 'Square' — kept in f32 (VPU math in f32 even on bf16 path)
    h = h * h
    # layer2: Linear(hidden_size, output_size); downcast only the matmul operand if
    # the weights are bf16 (no-op when everything is f32).
    o = jnp.dot(h.astype(w2_ref.dtype), w2_ref[...], preferred_element_type=jnp.float32)
    o_ref[...] = (o + b2_ref[...]).astype(o_ref.dtype)


def _round_up(n, m):
    return ((n + m - 1) // m) * m


def _pick_tile(batch, tile_m):
    """Pick a batch tile (multiple of 8) that doesn't over-pad and, when possible,
    yields >=2 grid steps so the 'parallel' axis can shard across v7x's 2 TCs."""
    b8 = _round_up(batch, 8)
    tm = _round_up(min(tile_m, b8), 8)
    if b8 // tm < 2 and b8 >= 16:
        tm = _round_up(b8 // 2, 8)
    b_p = _round_up(batch, tm)
    return tm, b_p


def make_net_params(w1, b1, w2, b2, param_dtype=jnp.float32):
    """Pad parameters ONCE (hoisted out of the forward path).

    w1: [in, hidden], b1: [hidden], w2: [hidden, out], b2: [out]
    (transpose of nn.Linear's [out, in] storage, so the kernel does plain matmuls).
    Hidden / output feature dims are zero-padded to multiples of 128 for lane-dense
    MXU tiles and unmasked output stores; padding is mathematically inert.
    Biases stay f32 (added to the f32 accumulator); weights may be bf16.
    """
    in_dim, hid = w1.shape
    out_dim = w2.shape[1]
    hid_p = _round_up(hid, 128)
    out_p = _round_up(out_dim, 128)

    w1_p = jnp.zeros((in_dim, hid_p), param_dtype).at[:, :hid].set(w1.astype(param_dtype))
    b1_p = jnp.zeros((1, hid_p), jnp.float32).at[0, :hid].set(b1.astype(jnp.float32))
    w2_p = jnp.zeros((hid_p, out_p), param_dtype).at[:hid, :out_dim].set(w2.astype(param_dtype))
    b2_p = jnp.zeros((1, out_p), jnp.float32).at[0, :out_dim].set(b2.astype(jnp.float32))
    return (w1_p, b1_p, w2_p, b2_p), out_dim


@functools.partial(jax.jit, static_argnames=("out_dim", "tile_m"))
def net_forward(x, w1_p, b1_p, w2_p, b2_p, *, out_dim, tile_m=1024):
    """out = ((x @ w1 + b1) ** 2) @ w2 + b2, computed in one Pallas kernel."""
    B, in_dim = x.shape
    hid_p = w1_p.shape[1]
    out_p = w2_p.shape[1]

    tm, B_p = _pick_tile(B, tile_m)

    # Only x needs per-call handling: cast to the matmul operand dtype and pad the
    # batch dim up to a tile multiple. Feature dim is left at in_dim (no 8x read amp).
    x_c = x.astype(w1_p.dtype)
    if B_p != B:
        x_c = jnp.zeros((B_p, in_dim), x_c.dtype).at[:B].set(x_c)

    grid = (B_p // tm,)

    out_padded = pl.pallas_call(
        mlp_square_kernel,
        out_shape=jax.ShapeDtypeStruct((B_p, out_p), jnp.float32),
        grid=grid,
        in_specs=[
            # x: tiled over batch; last dim equals full array dim (no 128 padding).
            pl.BlockSpec((tm, in_dim), lambda i: (i, 0)),
            # Weights / biases: VMEM-resident across all grid steps.
            pl.BlockSpec((in_dim, hid_p), lambda i: (0, 0)),
            pl.BlockSpec((1, hid_p), lambda i: (0, 0)),
            pl.BlockSpec((hid_p, out_p), lambda i: (0, 0)),
            pl.BlockSpec((1, out_p), lambda i: (0, 0)),
        ],
        out_specs=pl.BlockSpec((tm, out_p), lambda i: (i, 0)),
        compiler_params=pltpu.CompilerParams(
            dimension_semantics=("parallel",),
        ),
    )(x_c, w1_p, b1_p, w2_p, b2_p)

    # Strip batch + lane padding; fused into this jit (no standalone HBM copy).
    # TODO(synk): for maximum efficiency, let downstream consumers take the padded
    # (B_p, out_p) tensor directly and fuse the slice into them.
    return out_padded[:B, :out_dim]


if __name__ == "__main__":
    # Small shapes consistent with Net(input_size, hidden_size, output_size).
    batch, input_size, hidden_size, output_size = 64, 16, 32, 8

    key = jax.random.PRNGKey(0)
    k_x, k_w1, k_b1, k_w2, k_b2 = jax.random.split(key, 5)

    x = jax.random.normal(k_x, (batch, input_size), dtype=jnp.float32)
    # nn.Linear stores weight as [out, in]; kernel uses the [in, out] transpose.
    w1 = jax.random.normal(k_w1, (input_size, hidden_size), dtype=jnp.float32) * 0.1
    b1 = jax.random.normal(k_b1, (hidden_size,), dtype=jnp.float32) * 0.1
    w2 = jax.random.normal(k_w2, (hidden_size, output_size), dtype=jnp.float32) * 0.1
    b2 = jax.random.normal(k_b2, (output_size,), dtype=jnp.float32) * 0.1

    # Pad the parameters once (f32 operands for a tight reference check; pass
    # param_dtype=jnp.bfloat16 here for the bandwidth-optimized large-batch path).
    (w1_p, b1_p, w2_p, b2_p), out_dim = make_net_params(w1, b1, w2, b2)

    # Default tile picker yields tm=32 -> grid=(2,) here, so the grid actually
    # iterates (and would shard across both TCs on v7x).
    out = net_forward(x, w1_p, b1_p, w2_p, b2_p, out_dim=out_dim)
    jax.block_until_ready(out)

    # Reference check in plain JAX (same math as the PyTorch forward with 'Square').
    ref = ((x @ w1 + b1) ** 2) @ w2 + b2
    assert out.shape == (batch, output_size)
    assert jnp.allclose(out, ref, atol=1e-4, rtol=1e-4)

    print("KERNEL_OK")
</pallas_src>

<mosaic_0001>
module attributes {stable_mosaic.version = 11 : i64} {
  func.func @mlp_square_kernel(%arg0: i32, %arg1: memref<32x16xf32, #tpu.memory_space<vmem>>, %arg2: memref<16x128xf32, #tpu.memory_space<vmem>>, %arg3: memref<1x128xf32, #tpu.memory_space<vmem>>, %arg4: memref<128x128xf32, #tpu.memory_space<vmem>>, %arg5: memref<1x128xf32, #tpu.memory_space<vmem>>, %arg6: memref<32x128xf32, #tpu.memory_space<vmem>>) attributes {dimension_semantics = [#tpu.dimension_semantics<parallel>], iteration_bounds = array<i64: 2>, scalar_prefetch = 0 : i64, scratch_operands = 0 : i64, tpu.core_type = #tpu.core_type<tc>, window_params = [{transform_indices = @transform_0, window_bounds = array<i64: 32, 16>}, {pipeline_mode = #tpu.pipeline_mode<synchronous>, transform_indices = @transform_1, window_bounds = array<i64: 16, 128>}, {pipeline_mode = #tpu.pipeline_mode<synchronous>, transform_indices = @transform_2, window_bounds = array<i64: 1, 128>}, {pipeline_mode = #tpu.pipeline_mode<synchronous>, transform_indices = @transform_3, window_bounds = array<i64: 128, 128>}, {pipeline_mode = #tpu.pipeline_mode<synchronous>, transform_indices = @transform_4, window_bounds = array<i64: 1, 128>}, {transform_indices = @transform_5, window_bounds = array<i64: 32, 128>}]} {
    %c0 = arith.constant 0 : index
    %c0_0 = arith.constant 0 : index
    %0 = vector.load %arg1[%c0, %c0_0] : memref<32x16xf32, #tpu.memory_space<vmem>>, vector<32x16xf32>
    %c0_1 = arith.constant 0 : index
    %c0_2 = arith.constant 0 : index
    %1 = vector.load %arg2[%c0_1, %c0_2] : memref<16x128xf32, #tpu.memory_space<vmem>>, vector<16x128xf32>
    %cst = arith.constant dense<0.000000e+00> : vector<32x128xf32>
    %2 = tpu.matmul %0, %1, %cst {dimension_numbers = #tpu.dot_dimension_numbers<[1], [0], [0], [1], [0, 0, 1, 1], [], []>} : vector<32x16xf32>, vector<16x128xf32>, vector<32x128xf32> -> vector<32x128xf32>
    %c0_3 = arith.constant 0 : index
    %c0_4 = arith.constant 0 : index
    %3 = vector.load %arg3[%c0_3, %c0_4] : memref<1x128xf32, #tpu.memory_space<vmem>>, vector<1x128xf32>
    %4 = vector.broadcast %3 : vector<1x128xf32> to vector<32x128xf32>
    %5 = arith.addf %2, %4 : vector<32x128xf32>
    %6 = arith.mulf %5, %5 : vector<32x128xf32>
    %c0_5 = arith.constant 0 : index
    %c0_6 = arith.constant 0 : index
    %7 = vector.load %arg4[%c0_5, %c0_6] : memref<128x128xf32, #tpu.memory_space<vmem>>, vector<128x128xf32>
    %cst_7 = arith.constant dense<0.000000e+00> : vector<32x128xf32>
    %8 = tpu.matmul %6, %7, %cst_7 {dimension_numbers = #tpu.dot_dimension_numbers<[1], [0], [0], [1], [0, 0, 1, 1], [], []>} : vector<32x128xf32>, vector<128x128xf32>, vector<32x128xf32> -> vector<32x128xf32>
    %c0_8 = arith.constant 0 : index
    %c0_9 = arith.constant 0 : index
    %9 = vector.load %arg5[%c0_8, %c0_9] : memref<1x128xf32, #tpu.memory_space<vmem>>, vector<1x128xf32>
    %10 = vector.broadcast %9 : vector<1x128xf32> to vector<32x128xf32>
    %11 = arith.addf %8, %10 : vector<32x128xf32>
    %c0_10 = arith.constant 0 : index
    %c0_11 = arith.constant 0 : index
    %12 = vector.load %arg6[%c0_10, %c0_11] : memref<32x128xf32, #tpu.memory_space<vmem>>, vector<32x128xf32>
    tpu.vector_store %arg6[%c0_10, %c0_11], %11 {strides = array<i32>} : memref<32x128xf32, #tpu.memory_space<vmem>>, vector<32x128xf32>,
    return
  }
  func.func @transform_0(%arg0: i32) -> (i32, i32) {
    %c0_i32 = arith.constant 0 : i32
    %c0_i32_0 = arith.constant 0 : i32
    return %arg0, %c0_i32 : i32, i32
  }
  func.func @transform_1(%arg0: i32) -> (i32, i32) {
    %c0_i32 = arith.constant 0 : i32
    %c0_i32_0 = arith.constant 0 : i32
    %c0_i32_1 = arith.constant 0 : i32
    return %c0_i32, %c0_i32_0 : i32, i32
  }
  func.func @transform_2(%arg0: i32) -> (i32, i32) {
    %c0_i32 = arith.constant 0 : i32
    %c0_i32_0 = arith.constant 0 : i32
    %c0_i32_1 = arith.constant 0 : i32
    return %c0_i32, %c0_i32_0 : i32, i32
  }
  func.func @transform_3(%arg0: i32) -> (i32, i32) {
    %c0_i32 = arith.constant 0 : i32
    %c0_i32_0 = arith.constant 0 : i32
    %c0_i32_1 = arith.constant 0 : i32
    return %c0_i32, %c0_i32_0 : i32, i32
  }
  func.func @transform_4(%arg0: i32) -> (i32, i32) {
    %c0_i32 = arith.constant 0 : i32
    %c0_i32_0 = arith.constant 0 : i32
    %c0_i32_1 = arith.constant 0 : i32
    return %c0_i32, %c0_i32_0 : i32, i32
  }
  func.func @transform_5(%arg0: i32) -> (i32, i32) {
    %c0_i32 = arith.constant 0 : i32
    %c0_i32_0 = arith.constant 0 : i32
    return %arg0, %c0_i32 : i32, i32
  }
}

</mosaic_0001>

<llo_original>
// kernel: net_forward.1
$region0: #{net_forward.1}
  #allocation0 [shape = 'u32[]', space=smem, size = 0x4, offset = 0x4, fixed_abs, tag = 'smem constant byte address 0x4 - core index']
  #allocation1 [shape = 'u32[144,128]{1,0:T(1,128)}', space=vmem, size = 0x12000, scoped, tag = 'internal scratch']
  %s0 = inlined_call_operand.vmem [shape: f32[64,16], index: 0, kind: input, shape index: {}]
  %s1 = inlined_call_operand.vmem [shape: f32[16,128], index: 1, kind: input, shape index: {}]
  %s2 = inlined_call_operand.vmem [shape: f32[1,128], index: 2, kind: input, shape index: {}]
  %s3 = inlined_call_operand.hbm [shape: f32[128,128], index: 3, kind: input, shape index: {}]
  %s4 = inlined_call_operand.vmem [shape: f32[1,128], index: 4, kind: input, shape index: {}]
  %s5 = inlined_call_operand.vmem [shape: f32[64,128], index: 5, kind: output, shape index: {}]
  %s6 = sld [smem:[#allocation0]]
  $region57: #{net_forward.1} parent=0
    _
  %s8 = ssub.s32 1, %s6
  %s9 = scalar_select 0, %s8, %s6
  $region1: #{net_forward.1} parent=0
    #allocation2 [shape = 'u8[65536]{0}', space=vmem, size = 0x10000, scoped, tag = 'input window, operand 3, single buffered']
    #allocation3 [shape = 's32[2]{0}', space=sflag, size = 0x8, scoped, tag = 'scoped memory for net_forward.1']
    %10 = vsyncpa [#allocation3], 0
    loop: start=0, step=1, limit=4
    $region2: #{net_forward.1} parent=1 // loop_pre_header
      _
    $region3: #{net_forward.1} parent=1 // loop_header
      %s12 = sphi 0, %s16
      %p13 = scmp.ge.s32.totalorder %s12, 4
      %s22 = sphi 0, %s24
      %s25 = sphi 0, %s22
      %s26 = sphi 0, %s25
      %s42 = sphi 0, %s26
      %s46 = sphi 0, %s46
      %s48 = sphi 0, %s46
      %s49 = sphi 0, %s48
      %s63 = sphi 0, %s49
      %s67 = sphi 0, %s67
      %s69 = sphi 0, %s67
      %s70 = sphi 0, %s69
      %s84 = sphi 0, %s70
      %s88 = sphi 0, %s88
      %s90 = sphi 0, %s88
      %s91 = sphi 0, %s90
      %s105 = sphi 0, %s91
      %s109 = sphi 0, %s109
      %s111 = sphi 0, %s109
      %s112 = sphi 0, %s111
      %s126 = sphi 0, %s112
      %s132 = sphi 0, %s134
      %s135 = sphi 0, %s132
      %s136 = sphi 0, %s135
      %s152 = sphi 0, %s136
    $region4: #{net_forward.1} parent=1 // loop_header_branch
      %15 = sbr.rel (%p13) target = $region8
    $region5: #{net_forward.1} parent=1 // loop_body
      %s17 = ssub.s32 %s12, 1
      %s18 = ssub.s32 %s12, 2
      %s19 = sadd.s32 %s12, 1
      %s20 = ssub.s32 %s12, %s19
      %p21 = scmp.eq.s32.totalorder %s20, 0
      %s23 = sadd.s32 %s22, 1
      %s24 = scalar_select %p21, %s22, %s23
      %p27 = pneg %p21
      %p28 = scmp.eq.s32.totalorder %s12, 1
      %p29 = por %p27, %p28
      %p30 = scmp.ne.s32.totalorder %s22, %s25
      %p31 = scmp.eq.s32.totalorder %s12, 0
      %p32 = por %p30, %p31
      %p33 = scmp.ne.s32.totalorder %s22, %s25
      %p34 = scmp.eq.s32.totalorder %s17, 1
      %p35 = por %p33, %p34
      %p36 = scmp.ne.s32.totalorder %s25, %s26
      %p37 = scmp.eq.s32.totalorder %s17, 0
      %p38 = por %p36, %p37
      %p39 = scmp.ne.s32.totalorder %s25, %s26
      %p40 = scmp.eq.s32.totalorder %s18, 1
      %p41 = por %p39, %p40
      %p43 = scmp.ne.s32.totalorder %s26, %s42
      %p44 = scmp.eq.s32.totalorder %s18, 0
      %p45 = por %p43, %p44
      %s47 = sadd.s32 %s46, 1
      %p50 = scmp.eq.s32.totalorder %s12, 1
      %p51 = scmp.ne.s32.totalorder %s46, %s48
      %p52 = scmp.eq.s32.totalorder %s12, 0
      %p53 = por %p51, %p52
      %p54 = scmp.ne.s32.totalorder %s46, %s48
      %p55 = scmp.eq.s32.totalorder %s17, 1
      %p56 = por %p54, %p55
      %p57 = scmp.ne.s32.totalorder %s48, %s49
      %p58 = scmp.eq.s32.totalorder %s17, 0
      %p59 = por %p57, %p58
      %p60 = scmp.ne.s32.totalorder %s48, %s49
      %p61 = scmp.eq.s32.totalorder %s18, 1
      %p62 = por %p60, %p61
      %p64 = scmp.ne.s32.totalorder %s49, %s63
      %p65 = scmp.eq.s32.totalorder %s18, 0
      %p66 = por %p64, %p65
      %s68 = sadd.s32 %s67, 1
      %p71 = scmp.eq.s32.totalorder %s12, 1
      %p72 = scmp.ne.s32.totalorder %s67, %s69
      %p73 = scmp.eq.s32.totalorder %s12, 0
      %p74 = por %p72, %p73
      %p75 = scmp.ne.s32.totalorder %s67, %s69
      %p76 = scmp.eq.s32.totalorder %s17, 1
      %p77 = por %p75, %p76
      %p78 = scmp.ne.s32.totalorder %s69, %s70
      %p79 = scmp.eq.s32.totalorder %s17, 0
      %p80 = por %p78, %p79
      %p81 = scmp.ne.s32.totalorder %s69, %s70
      %p82 = scmp.eq.s32.totalorder %s18, 1
      %p83 = por %p81, %p82
      %p85 = scmp.ne.s32.totalorder %s70, %s84
      %p86 = scmp.eq.s32.totalorder %s18, 0
      %p87 = por %p85, %p86
      %s89 = sadd.s32 %s88, 1
      %p92 = scmp.eq.s32.totalorder %s12, 1
      %p93 = scmp.ne.s32.totalorder %s88, %s90
      %p94 = scmp.eq.s32.totalorder %s12, 0
      %p95 = por %p93, %p94
      %p96 = scmp.ne.s32.totalorder %s88, %s90
      %p97 = scmp.eq.s32.totalorder %s17, 1
      %p98 = por %p96, %p97
      %p99 = scmp.ne.s32.totalorder %s90, %s91
      %p100 = scmp.eq.s32.totalorder %s17, 0
      %p101 = por %p99, %p100
      %p102 = scmp.ne.s32.totalorder %s90, %s91
      %p103 = scmp.eq.s32.totalorder %s18, 1
      %p104 = por %p102, %p103
      %p106 = scmp.ne.s32.totalorder %s91, %s105
      %p107 = scmp.eq.s32.totalorder %s18, 0
      %p108 = por %p106, %p107
      %s110 = sadd.s32 %s109, 1
      %p113 = scmp.eq.s32.totalorder %s12, 1
      %p114 = scmp.ne.s32.totalorder %s109, %s111
      %p115 = scmp.eq.s32.totalorder %s12, 0
      %p116 = por %p114, %p115
      %p117 = scmp.ne.s32.totalorder %s109, %s111
      %p118 = scmp.eq.s32.totalorder %s17, 1
      %p119 = por %p117, %p118
      %p120 = scmp.ne.s32.totalorder %s111, %s112
      %p121 = scmp.eq.s32.totalorder %s17, 0
      %p122 = por %p120, %p121
      %p123 = scmp.ne.s32.totalorder %s111, %s112
      %p124 = scmp.eq.s32.totalorder %s18, 1
      %p125 = por %p123, %p124
      %p127 = scmp.ne.s32.totalorder %s112, %s126
      %p128 = scmp.eq.s32.totalorder %s18, 0
      %p129 = por %p127, %p128
      %s130 = ssub.s32 %s12, %s19
      %p131 = scmp.eq.s32.totalorder %s130, 0
      %s133 = sadd.s32 %s132, 1
      %s134 = scalar_select %p131, %s132, %s133
      %p137 = pneg %p131
      %p138 = scmp.eq.s32.totalorder %s12, 1
      %p139 = por %p137, %p138
      %p140 = scmp.ne.s32.totalorder %s132, %s135
      %p141 = scmp.eq.s32.totalorder %s12, 0
      %p142 = por %p140, %p141
      %p143 = scmp.ne.s32.totalorder %s132, %s135
      %p144 = scmp.eq.s32.totalorder %s17, 1
      %p145 = por %p143, %p144
      %p146 = scmp.ne.s32.totalorder %s135, %s136
      %p147 = scmp.eq.s32.totalorder %s17, 0
      %p148 = por %p146, %p147
      %p149 = scmp.ne.s32.totalorder %s135, %s136
      %p150 = scmp.eq.s32.totalorder %s18, 1
      %p151 = por %p149, %p150
      %p153 = scmp.ne.s32.totalorder %s136, %s152
      %p154 = scmp.eq.s32.totalorder %s18, 0
      %p155 = por %p153, %p154
      %p156 = scmp.le.s32.totalorder 1, %s12
      %p157 = scmp.lt.s32.totalorder %s12, 3
      %p158 = pnand %p156, %p157
      %p159 = pneg %p158
      // Predicated region
      $region9: #{net_forward.1} parent=5 // pred_check
        _
      $region10: #{net_forward.1} parent=5 // pred_check_branch
        %161 = sbr.rel (%p158) target = $region12
      $region11: #{net_forward.1} parent=5 // pred_region
        %s162 = ssub.s32 %s12, 1
        // Predicated region
        $region13: #{net_forward.1} parent=11 // pred_check
          %p163 = pneg %p59
        $region14: #{net_forward.1} parent=11 // pred_check_branch
          %165 = sbr.rel (%p163) target = $region16
        $region15: #{net_forward.1} parent=11 // pred_region
          _
        $region16: #{net_forward.1} parent=11 // pred_fallthru
          _
        // Predicated region
        $region17: #{net_forward.1} parent=11 // pred_check
          %p166 = pneg %p80
        $region18: #{net_forward.1} parent=11 // pred_check_branch
          %168 = sbr.rel (%p166) target = $region20
        $region19: #{net_forward.1} parent=11 // pred_region
          _
        $region20: #{net_forward.1} parent=11 // pred_fallthru
          _
        // Predicated region
        $region21: #{net_forward.1} parent=11 // pred_check
          %p169 = pneg %p101
        $region22: #{net_forward.1} parent=11 // pred_check_branch
          %171 = sbr.rel (%p169) target = $region24
        $region23: #{net_forward.1} parent=11 // pred_region
          %s173 = ssub.s32 2048, 2048
          %174 = vsyncadd [#allocation3], %s173
          %s175 = sshll.u32 [#allocation2], 4
          %s176 = int_to_ptr.vmem [resolvable:$true] %s175
          %181 = dma.hbm_to_vmem [thread:$0]  %s3, 2048, %s176, [#allocation3], 128, 128, 8
        $region24: #{net_forward.1} parent=11 // pred_fallthru
          _
        // Predicated region
        $region25: #{net_forward.1} parent=11 // pred_check
          %p182 = pneg %p122
        $region26: #{net_forward.1} parent=11 // pred_check_branch
          %184 = sbr.rel (%p182) target = $region28
        $region27: #{net_forward.1} parent=11 // pred_region
          _
        $region28: #{net_forward.1} parent=11 // pred_fallthru
          _
      $region12: #{net_forward.1} parent=5 // pred_fallthru
        _
      %p185 = scmp.lt.s32.totalorder %s12, 2
      // Predicated region
      $region29: #{net_forward.1} parent=5 // pred_check
        %p186 = pneg %p185
      $region30: #{net_forward.1} parent=5 // pred_check_branch
        %188 = sbr.rel (%p186) target = $region32
      $region31: #{net_forward.1} parent=5 // pred_region
        // Predicated region
        $region33: #{net_forward.1} parent=31 // pred_check
          %p189 = pneg %p32
        $region34: #{net_forward.1} parent=31 // pred_check_branch
          %191 = sbr.rel (%p189) target = $region36
        $region35: #{net_forward.1} parent=31 // pred_region
          %s192 = smul.u32 4, %s12
          %p193 = scmp.lt.s32.totalorder %s192, 7
          %s194 = scalar_select %p193, %s192, 7
          %s195 = smul.addr %s194, 8
          %s196 = scalar_lea.vmem %s0, %s195
          %s197 = smul.u32 4, %s12
        $region36: #{net_forward.1} parent=31 // pred_fallthru
          _
      $region32: #{net_forward.1} parent=5 // pred_fallthru
        _
      %p198 = scmp.le.s32.totalorder 1, %s12
      %p199 = scmp.lt.s32.totalorder %s12, 3
      %p200 = pnand %p198, %p199
      %p201 = pneg %p200
      // Predicated region
      $region37: #{net_forward.1} parent=5 // pred_check
        _
      $region38: #{net_forward.1} parent=5 // pred_check_branch
        %203 = sbr.rel (%p200) target = $region40
      $region39: #{net_forward.1} parent=5 // pred_region
        %s204 = ssub.s32 %s12, 1
        // Predicated region
        $region41: #{net_forward.1} parent=39 // pred_check
          %p205 = pneg %p101
        $region42: #{net_forward.1} parent=39 // pred_check_branch
          %207 = sbr.rel (%p205) target = $region44
        $region43: #{net_forward.1} parent=39 // pred_region
          %208 = dma.done [#allocation3], 2048
        $region44: #{net_forward.1} parent=39 // pred_fallthru
          _
        %s209 = smul.u32 4, %s17
        %p210 = scmp.lt.s32.totalorder %s209, 7
        %s211 = scalar_select %p210, %s209, 7
        %s212 = smul.addr %s211, 8
        %s213 = scalar_lea.vmem %s0, %s212
        %p214 = pneg %p38
        %p215 = pneg %p35
        %p216 = pneg %p59
        %p217 = pneg %p56
        %p218 = pneg %p80
        %p219 = pneg %p77
        %p220 = pneg %p101
        %p221 = pneg %p98
        %p222 = pneg %p122
        %p223 = pneg %p119
        %p224 = pneg %p148
        %p225 = pneg %p145
        %s226 = smul.u32 4, %s17
        %p227 = scmp.lt.s32.totalorder %s226, 7
        %s228 = scalar_select %p227, %s226, 7
        %s229 = smul.addr %s228, 8
        %s230 = scalar_lea.vmem %s5, %s229
        %s231 = smul.u32 4, %s17
        %p232 = scmp.lt.s32.totalorder %s231, 7
        %s233 = scalar_select %p232, %s231, 7
        %s234 = smul.addr %s233, 8
        %s235 = scalar_lea.vmem %s0, %s234
        %s236 = smul.u32 4, %s17
        %s237 = smul.u32 4, %s17
        %p238 = scmp.lt.s32.totalorder %s237, 7
        %s239 = scalar_select %p238, %s237, 7
        %s240 = smul.addr %s239, 8
        %s241 = scalar_lea.vmem %s5, %s240
        %s242 = smul.u32 4, %s17
        %v243 = vld [vmem:[%s235] sm:$0xff]
        %v244 = vld [vmem:[%s235 + $0x8] sm:$0xff]
        %v245 = vld [vmem:[%s235 + $0x10] sm:$0xff]
        %v246 = vld [vmem:[%s235 + $0x18] sm:$0xff]
        %v247 = vld [vmem:[%s1] sm:$0xff]
        %v248 = vld [vmem:[%s1 + $0x8] sm:$0xff]
        %v249 = vld [vmem:[%s2] sm:$0x1]
        %v251 = vlaneseq
        %v252 = vshrl.u32 %v251, 7
        %v253 = vsub.s32 0, %v252
        %v254 = vrot.slane %v249, %v253
        %vm256 = vcmask 130048
        %v258 = vsel %vm256, %v243, 0
        %v261 = vsel %vm256, %v244, 0
        %v264 = vsel %vm256, %v245, 0
        %v267 = vsel %vm256, %v246, 0
        %269 = vmatprep.subr.mxu0 0.0
        %270 = vmatpush1.msra.mxu0 %v247
        %271 = vmatprep.subr.mxu0 0.0
        %272 = vmatpush1.msra.mxu0 %v248
        %273 = vmatprep.subr.mxu0 0.0
        %274 = vmatpush1.msra.mxu0 0.0
        %275 = vmatprep.subr.mxu0 0.0
        %276 = vmatpush1.msra.mxu0 0.0
        %277 = vmatprep.subr.mxu0 0.0
        %278 = vmatpush1.msra.mxu0 0.0
        %279 = vmatprep.subr.mxu0 0.0
        %280 = vmatpush1.msra.mxu0 0.0
        %281 = vmatprep.subr.mxu0 0.0
        %282 = vmatpush1.msra.mxu0 0.0
        %283 = vmatprep.subr.mxu0 0.0
        %284 = vmatpush1.msra.mxu0 0.0
        %285 = vmatprep.subr.mxu0 0.0
        %286 = vmatpush1.msra.mxu0 0.0
        %287 = vmatprep.subr.mxu0 0.0
        %288 = vmatpush1.msra.mxu0 0.0
        %289 = vmatprep.subr.mxu0 0.0
        %290 = vmatpush1.msra.mxu0 0.0
        %291 = vmatprep.subr.mxu0 0.0
        %292 = vmatpush1.msra.mxu0 0.0
        %293 = vmatprep.subr.mxu0 0.0
        %294 = vmatpush1.msra.mxu0 0.0
        %295 = vmatprep.subr.mxu0 0.0
        %296 = vmatpush1.msra.mxu0 0.0
        %297 = vmatprep.subr.mxu0 0.0
        %298 = vmatpush1.msra.mxu0 0.0
        %299 = vmatprep.subr.mxu0 0.0
        %300 = vmatpush1.msra.mxu0 0.0
        %301 = vmatprep.subr.mxu0 0.0
        %302 = vmatpush1.msra.mxu0 0.0
        %303 = vmatprep.subr.mxu0 0.0
        %304 = vmatpush1.msra.mxu0 0.0
        %305 = vmatprep.subr.mxu0 0.0
        %306 = vmatpush1.msra.mxu0 0.0
        %307 = vmatprep.subr.mxu0 0.0
        %308 = vmatpush1.msra.mxu0 0.0
        %309 = vmatprep.subr.mxu0 0.0
        %310 = vmatpush1.msra.mxu0 0.0
        %311 = vmatprep.subr.mxu0 0.0
        %312 = vmatpush1.msra.mxu0 0.0
        %313 = vmatprep.subr.mxu0 0.0
        %314 = vmatpush1.msra.mxu0 0.0
        %315 = vmatprep.subr.mxu0 0.0
        %316 = vmatpush1.msra.mxu0 0.0
        %317 = vmatprep.subr.mxu0 0.0
        %318 = vmatpush1.msra.mxu0 0.0
        %319 = vmatprep.subr.mxu0 0.0
        %320 = vmatpush1.msra.mxu0 0.0
        %321 = vmatprep.subr.mxu0 0.0
        %322 = vmatpush1.msra.mxu0 0.0
        %323 = vmatprep.subr.mxu0 0.0
        %324 = vmatpush1.msra.mxu0 0.0
        %325 = vmatprep.subr.mxu0 0.0
        %326 = vmatpush1.msra.mxu0 0.0
        %327 = vmatprep.subr.mxu0 0.0
        %328 = vmatpush1.msra.mxu0 0.0
        %329 = vmatprep.subr.mxu0 0.0
        %330 = vmatpush1.msra.mxu0 0.0
        %331 = vmatprep.subr.mxu0 0.0
        %332 = vmatpush1.msra.mxu0 0.0
        %333 = vmatprep.mubr.f32.mxu0 0.0
        %334 = vmatmul.mubr.f32.gmra.mrb[0].mxu0 %v258
        %v335 = vpop.f32.mrb[0].mxu0
        %v336 = vadd.f32 %v254, %v335
        %v337 = vpop.f32.mrb[0].mxu0
        %338 = vmatprep.mubr.f32.mxu0 0.0
        %339 = vmatmul.mubr.f32.gmra.mrb[0].mxu0 %v261
        %v340 = vpop.f32.mrb[0].mxu0
        %v341 = vadd.f32 %v254, %v340
        %v342 = vpop.f32.mrb[0].mxu0
        %343 = vmatprep.mubr.f32.mxu0 0.0
        %344 = vmatmul.mubr.f32.gmra.mrb[0].mxu0 %v264
        %v345 = vpop.f32.mrb[0].mxu0
        %v346 = vadd.f32 %v254, %v345
        %v347 = vpop.f32.mrb[0].mxu0
        %348 = vmatprep.mubr.f32.mxu0 0.0
        %349 = vmatmul.mubr.f32.gmra.mrb[0].mxu0 %v267
        %v350 = vpop.f32.mrb[0].mxu0
        %v351 = vadd.f32 %v254, %v350
        %v352 = vpop.f32.mrb[0].mxu0
        %353 = vdwg.mxu0
        %v354 = vmul.f32 %v336, %v336
        %v355 = vmul.f32 %v341, %v341
        %v356 = vmul.f32 %v346, %v346
        %v357 = vmul.f32 %v351, %v351
        %v358 = vld [vmem:[#allocation2] sm:$0xff]
        %v359 = vld [vmem:[#allocation2 + $0x8] sm:$0xff]
        %v360 = vld [vmem:[#allocation2 + $0x10] sm:$0xff]
        %v361 = vld [vmem:[#allocation2 + $0x18] sm:$0xff]
        %v362 = vld [vmem:[#allocation2 + $0x20] sm:$0xff]
        %v363 = vld [vmem:[#allocation2 + $0x28] sm:$0xff]
        %v364 = vld [vmem:[#allocation2 + $0x30] sm:$0xff]
        %v365 = vld [vmem:[#allocation2 + $0x38] sm:$0xff]
        %v366 = vld [vmem:[#allocation2 + $0x40] sm:$0xff]
        %v367 = vld [vmem:[#allocation2 + $0x48] sm:$0xff]
        %v368 = vld [vmem:[#allocation2 + $0x50] sm:$0xff]
        %v369 = vld [vmem:[#allocation2 + $0x58] sm:$0xff]
        %v370 = vld [vmem:[#allocation2 + $0x60] sm:$0xff]
        %v371 = vld [vmem:[#allocation2 + $0x68] sm:$0xff]
        %v372 = vld [vmem:[#allocation2 + $0x70] sm:$0xff]
        %v373 = vld [vmem:[#allocation2 + $0x78] sm:$0xff]
        %v374 = vld [vmem:[%s4] sm:$0x1]
        %v376 = vlaneseq
        %v377 = vshrl.u32 %v376, 7
        %v378 = vsub.s32 0, %v377
        %v379 = vrot.slane %v374, %v378
        %381 = vmatprep.subr.mxu0 0.0
        %382 = vmatpush1.msra.mxu0 %v358
        %383 = vmatprep.subr.mxu0 0.0
        %384 = vmatpush1.msra.mxu0 %v359
        %385 = vmatprep.subr.mxu0 0.0
        %386 = vmatpush1.msra.mxu0 %v360
        %387 = vmatprep.subr.mxu0 0.0
        %388 = vmatpush1.msra.mxu0 %v361
        %389 = vmatprep.subr.mxu0 0.0
        %390 = vmatpush1.msra.mxu0 %v362
        %391 = vmatprep.subr.mxu0 0.0
        %392 = vmatpush1.msra.mxu0 %v363
        %393 = vmatprep.subr.mxu0 0.0
        %394 = vmatpush1.msra.mxu0 %v364
        %395 = vmatprep.subr.mxu0 0.0
        %396 = vmatpush1.msra.mxu0 %v365
        %397 = vmatprep.subr.mxu0 0.0
        %398 = vmatpush1.msra.mxu0 %v366
        %399 = vmatprep.subr.mxu0 0.0
        %400 = vmatpush1.msra.mxu0 %v367
        %401 = vmatprep.subr.mxu0 0.0
        %402 = vmatpush1.msra.mxu0 %v368
        %403 = vmatprep.subr.mxu0 0.0
        %404 = vmatpush1.msra.mxu0 %v369
        %405 = vmatprep.subr.mxu0 0.0
        %406 = vmatpush1.msra.mxu0 %v370
        %407 = vmatprep.subr.mxu0 0.0
        %408 = vmatpush1.msra.mxu0 %v371
        %409 = vmatprep.subr.mxu0 0.0
        %410 = vmatpush1.msra.mxu0 %v372
        %411 = vmatprep.subr.mxu0 0.0
        %412 = vmatpush1.msra.mxu0 %v373
        %413 = vmatprep.subr.mxu0 0.0
        %414 = vmatpush1.msra.mxu0 0.0
        %415 = vmatprep.subr.mxu0 0.0
        %416 = vmatpush1.msra.mxu0 0.0
        %417 = vmatprep.subr.mxu0 0.0
        %418 = vmatpush1.msra.mxu0 0.0
        %419 = vmatprep.subr.mxu0 0.0
        %420 = vmatpush1.msra.mxu0 0.0
        %421 = vmatprep.subr.mxu0 0.0
        %422 = vmatpush1.msra.mxu0 0.0
        %423 = vmatprep.subr.mxu0 0.0
        %424 = vmatpush1.msra.mxu0 0.0
        %425 = vmatprep.subr.mxu0 0.0
        %426 = vmatpush1.msra.mxu0 0.0
        %427 = vmatprep.subr.mxu0 0.0
        %428 = vmatpush1.msra.mxu0 0.0
        %429 = vmatprep.subr.mxu0 0.0
        %430 = vmatpush1.msra.mxu0 0.0
        %431 = vmatprep.subr.mxu0 0.0
        %432 = vmatpush1.msra.mxu0 0.0
        %433 = vmatprep.subr.mxu0 0.0
        %434 = vmatpush1.msra.mxu0 0.0
        %435 = vmatprep.subr.mxu0 0.0
        %436 = vmatpush1.msra.mxu0 0.0
        %437 = vmatprep.subr.mxu0 0.0
        %438 = vmatpush1.msra.mxu0 0.0
        %439 = vmatprep.subr.mxu0 0.0
        %440 = vmatpush1.msra.mxu0 0.0
        %441 = vmatprep.subr.mxu0 0.0
        %442 = vmatpush1.msra.mxu0 0.0
        %443 = vmatprep.subr.mxu0 0.0
        %444 = vmatpush1.msra.mxu0 0.0
        %445 = vmatprep.mubr.f32.mxu0 0.0
        %446 = vmatmul.mubr.f32.gmra.mrb[0].mxu0 %v354
        %v447 = vpop.f32.mrb[0].mxu0
        %v448 = vadd.f32 %v379, %v447
        %v449 = vpop.f32.mrb[0].mxu0
        %450 = vmatprep.mubr.f32.mxu0 0.0
        %451 = vmatmul.mubr.f32.gmra.mrb[0].mxu0 %v355
        %v452 = vpop.f32.mrb[0].mxu0
        %v453 = vadd.f32 %v379, %v452
        %v454 = vpop.f32.mrb[0].mxu0
        %455 = vmatprep.mubr.f32.mxu0 0.0
        %456 = vmatmul.mubr.f32.gmra.mrb[0].mxu0 %v356
        %v457 = vpop.f32.mrb[0].mxu0
        %v458 = vadd.f32 %v379, %v457
        %v459 = vpop.f32.mrb[0].mxu0
        %460 = vmatprep.mubr.f32.mxu0 0.0
        %461 = vmatmul.mubr.f32.gmra.mrb[0].mxu0 %v357
        %v462 = vpop.f32.mrb[0].mxu0
        %v463 = vadd.f32 %v379, %v462
        %v464 = vpop.f32.mrb[0].mxu0
        %465 = vdwg.mxu0
        %466 = vst [vmem:[%s241] sm:$0xff] %v448
        %467 = vst [vmem:[%s241 + $0x8] sm:$0xff] %v453
        %468 = vst [vmem:[%s241 + $0x10] sm:$0xff] %v458
        %469 = vst [vmem:[%s241 + $0x18] sm:$0xff] %v463
        %s470 = smul.u32 4, %s17
        %p471 = scmp.lt.s32.totalorder %s470, 7
        %s472 = scalar_select %p471, %s470, 7
        %s473 = smul.addr %s472, 8
        %s474 = scalar_lea.vmem %s5, %s473
        // Predicated region
        $region45: #{net_forward.1} parent=39 // pred_check
          %p475 = pneg %p145
        $region46: #{net_forward.1} parent=39 // pred_check_branch
          %477 = sbr.rel (%p475) target = $region48
        $region47: #{net_forward.1} parent=39 // pred_region
          %s478 = smul.u32 4, %s17
        $region48: #{net_forward.1} parent=39 // pred_fallthru
          _
      $region40: #{net_forward.1} parent=5 // pred_fallthru
        _
      %p479 = scmp.le.s32.totalorder 2, %s12
      // Predicated region
      $region49: #{net_forward.1} parent=5 // pred_check
        %p480 = pneg %p479
      $region50: #{net_forward.1} parent=5 // pred_check_branch
        %482 = sbr.rel (%p480) target = $region52
      $region51: #{net_forward.1} parent=5 // pred_region
        %s483 = ssub.s32 %s12, 2
        // Predicated region
        $region53: #{net_forward.1} parent=51 // pred_check
          %p484 = pneg %p151
        $region54: #{net_forward.1} parent=51 // pred_check_branch
          %486 = sbr.rel (%p484) target = $region56
        $region55: #{net_forward.1} parent=51 // pred_region
          %s487 = smul.u32 4, %s18
          %p488 = scmp.lt.s32.totalorder %s487, 7
          %s489 = scalar_select %p488, %s487, 7
          %s490 = smul.addr %s489, 8
          %s491 = scalar_lea.vmem %s5, %s490
        $region56: #{net_forward.1} parent=51 // pred_fallthru
          _
      $region52: #{net_forward.1} parent=5 // pred_fallthru
        _
    $region6: #{net_forward.1} parent=1 // loop_footer
      %s16 = sadd.s32 1, %s12
    $region7: #{net_forward.1} parent=1 // loop_footer_branch
      %11 = sbr.rel target = $region3
    $region8: #{net_forward.1} parent=1 // loop_exit
      _
    %492 = vsyncpa [#allocation3], 1
    %s493 = scalar_lea.sflag [#allocation3], 1
    %494 = vsyncpa %s493, 1

</llo_original>
